<compile_context>
chip_gen: v5e
topology: v5e:2x2
jax: 0.10.0
libtpu: 0.0.40
codegen_flags: <defaults>
</compile_context>

<pallas_src>
import jax
import jax.numpy as jnp
from jax.experimental import pallas as pl
from jax.experimental.pallas import tpu as pltpu


LANE = 128
_BLOCK_BYTES_TARGET = 2 * 1024 * 1024  # bytes per (2, tile_m, 128) block


def _pair_invariant_kernel(x_ref, o_ref):
    # x_ref / o_ref: (2, tile_m, 128) VMEM blocks; x_ref[p] is a dense slab.
    x0 = x_ref[0]
    x1 = x_ref[1]
    o_ref[0] = (x0 + x1) * 0.5          # mean over the size-2 pair axis
    o_ref[1] = jnp.abs(x0 - x1) * 0.5   # half absolute difference


def _tile_m_for(dtype, m):
    """Pick a sublane-aligned tile over M targeting ~2 MiB per block."""
    itemsize = jnp.dtype(dtype).itemsize
    tile = _BLOCK_BYTES_TARGET // (2 * LANE * itemsize)
    sub = max(8, 32 // itemsize)        # 8 for f32, 16 for bf16, 32 for 8-bit
    tile = max(sub, (tile // sub) * sub)
    return m if m <= tile else tile     # full-dim block is always legal


def _pair_invariant_3d(x3d):
    """x3d: (2, M, 128) -> (2, M, 128)."""
    m = x3d.shape[1]
    tile_m = _tile_m_for(x3d.dtype, m)
    grid = (pl.cdiv(m, tile_m),)
    return pl.pallas_call(
        _pair_invariant_kernel,
        out_shape=jax.ShapeDtypeStruct(x3d.shape, x3d.dtype),
        grid_spec=pltpu.PrefetchScalarGridSpec(
            num_scalar_prefetch=0,
            grid=grid,
            in_specs=[pl.BlockSpec((2, tile_m, LANE), lambda i: (0, i, 0))],
            out_specs=pl.BlockSpec((2, tile_m, LANE), lambda i: (0, i, 0)),
        ),
        compiler_params=pltpu.CompilerParams(
            dimension_semantics=("parallel",),  # shards grid across TCs on v7x
        ),
    )(x3d)


def pair_invariantizer(x, pair_dim: int = 0):
    """JAX/Pallas equivalent of PairInvariantizer.forward.

    x: float array whose `pair_dim` axis has size 2. Returns an array of the
    same shape/dtype where index 0 along pair_dim is the pair mean and index 1
    is half the absolute difference.
    """
    assert x.shape[pair_dim] == 2, "pair dimension must have size 2"
    assert jnp.issubdtype(x.dtype, jnp.floating), "float dtypes only"

    # TODO(synk): for pair_dim != 0 this moveaxis is a full HBM transpose; a
    # BlockSpec written against the original layout would avoid it.
    xm = x if pair_dim == 0 else jnp.moveaxis(x, pair_dim, 0)
    rest_shape = xm.shape[1:]
    n = 1
    for d in rest_shape:
        n *= d

    # Only pad if the flat size is not a lane multiple (rare); otherwise the
    # reshape to (2, M, 128) is free (row-major, no data movement).
    pad = (-n) % LANE
    x2d = xm.reshape(2, n)
    if pad:
        x2d = jnp.pad(x2d, ((0, 0), (0, pad)))
    m = (n + pad) // LANE
    x3d = x2d.reshape(2, m, LANE)

    out3d = _pair_invariant_3d(x3d)

    out2d = out3d.reshape(2, m * LANE)
    if pad:
        out2d = out2d[:, :n]
    out = out2d.reshape((2,) + rest_shape)
    return out if pair_dim == 0 else jnp.moveaxis(out, 0, pair_dim)


def _reference(x, pair_dim: int = 0):
    mean = jnp.mean(x, axis=pair_dim)
    x0 = jnp.take(x, 0, axis=pair_dim)
    x1 = jnp.take(x, 1, axis=pair_dim)
    abs_diff = 0.5 * jnp.abs(x0 - x1)
    return jnp.stack((mean, abs_diff), axis=pair_dim)


if __name__ == "__main__":
    key = jax.random.PRNGKey(0)
    # pair=2, channels=4, spatial 16x16 (pair_dim=0)
    x = jax.random.normal(key, (2, 4, 16, 16), dtype=jnp.float32)

    out = pair_invariantizer(x, pair_dim=0)
    out = jax.block_until_ready(out)

    ref = _reference(x, pair_dim=0)
    assert out.shape == x.shape and out.dtype == x.dtype
    assert jnp.allclose(out, ref, atol=1e-6, rtol=1e-6)

    print("KERNEL_OK")
</pallas_src>

<mosaic_0001>
module attributes {stable_mosaic.version = 11 : i64} {
  func.func @_pair_invariant_kernel(%arg0: i32, %arg1: memref<2x8x128xf32, #tpu.memory_space<vmem>>, %arg2: memref<2x8x128xf32, #tpu.memory_space<vmem>>) attributes {dimension_semantics = [#tpu.dimension_semantics<parallel>], iteration_bounds = array<i64: 1>, scalar_prefetch = 0 : i64, scratch_operands = 0 : i64, tpu.core_type = #tpu.core_type<tc>, window_params = [{transform_indices = @transform_0, window_bounds = array<i64: 2, 8, 128>}, {transform_indices = @transform_1, window_bounds = array<i64: 2, 8, 128>}]} {
    %c0 = arith.constant 0 : index
    %c0_0 = arith.constant 0 : index
    %c0_1 = arith.constant 0 : index
    %0 = vector.load %arg1[%c0, %c0_0, %c0_1] : memref<2x8x128xf32, #tpu.memory_space<vmem>>, vector<1x8x128xf32>
    %1 = vector.shape_cast %0 : vector<1x8x128xf32> to vector<8x128xf32>
    %c1 = arith.constant 1 : index
    %c0_2 = arith.constant 0 : index
    %c0_3 = arith.constant 0 : index
    %2 = vector.load %arg1[%c1, %c0_2, %c0_3] : memref<2x8x128xf32, #tpu.memory_space<vmem>>, vector<1x8x128xf32>
    %3 = vector.shape_cast %2 : vector<1x8x128xf32> to vector<8x128xf32>
    %4 = arith.addf %1, %3 : vector<8x128xf32>
    %cst = arith.constant 5.000000e-01 : f32
    %5 = vector.broadcast %cst : f32 to vector<8x128xf32>
    %6 = arith.mulf %4, %5 : vector<8x128xf32>
    %c0_4 = arith.constant 0 : index
    %c0_5 = arith.constant 0 : index
    %c0_6 = arith.constant 0 : index
    %7 = vector.load %arg2[%c0_4, %c0_5, %c0_6] : memref<2x8x128xf32, #tpu.memory_space<vmem>>, vector<1x8x128xf32>
    %8 = vector.shape_cast %7 : vector<1x8x128xf32> to vector<8x128xf32>
    %9 = vector.shape_cast %6 : vector<8x128xf32> to vector<1x8x128xf32>
    tpu.vector_store %arg2[%c0_4, %c0_5, %c0_6], %9 {strides = array<i32>} : memref<2x8x128xf32, #tpu.memory_space<vmem>>, vector<1x8x128xf32>,
    %10 = arith.subf %1, %3 : vector<8x128xf32>
    %11 = math.absf %10 : vector<8x128xf32>
    %cst_7 = arith.constant 5.000000e-01 : f32
    %12 = vector.broadcast %cst_7 : f32 to vector<8x128xf32>
    %13 = arith.mulf %11, %12 : vector<8x128xf32>
    %c1_8 = arith.constant 1 : index
    %c0_9 = arith.constant 0 : index
    %c0_10 = arith.constant 0 : index
    %14 = vector.load %arg2[%c1_8, %c0_9, %c0_10] : memref<2x8x128xf32, #tpu.memory_space<vmem>>, vector<1x8x128xf32>
    %15 = vector.shape_cast %14 : vector<1x8x128xf32> to vector<8x128xf32>
    %16 = vector.shape_cast %13 : vector<8x128xf32> to vector<1x8x128xf32>
    tpu.vector_store %arg2[%c1_8, %c0_9, %c0_10], %16 {strides = array<i32>} : memref<2x8x128xf32, #tpu.memory_space<vmem>>, vector<1x8x128xf32>,
    return
  }
  func.func @transform_0(%arg0: i32) -> (i32, i32, i32) {
    %c0_i32 = arith.constant 0 : i32
    %c0_i32_0 = arith.constant 0 : i32
    %c0_i32_1 = arith.constant 0 : i32
    return %c0_i32, %arg0, %c0_i32_0 : i32, i32, i32
  }
  func.func @transform_1(%arg0: i32) -> (i32, i32, i32) {
    %c0_i32 = arith.constant 0 : i32
    %c0_i32_0 = arith.constant 0 : i32
    %c0_i32_1 = arith.constant 0 : i32
    return %c0_i32, %arg0, %c0_i32_0 : i32, i32, i32
  }
}

</mosaic_0001>

<llo_original>
// kernel: tpu_custom_call.1
$region0: #{tpu_custom_call.1}
  #allocation0 [shape = 'u32[]', space=smem, size = 0x4, offset = 0x4, fixed_abs, tag = 'smem constant byte address 0x4 - core index']
  #allocation1 [shape = 'u32[72,128]{1,0:T(1,128)}', space=vmem, size = 0x9000, scoped, tag = 'internal scratch']
  %s0 = inlined_call_operand.hbm [shape: f32[2,8,128], index: 0, kind: input, shape index: {}]
  %s1 = inlined_call_operand.hbm [shape: f32[2,8,128], index: 1, kind: output, shape index: {}]
  %s2 = sld [smem:[#allocation0]]
  $region18: #{tpu_custom_call.1} parent=0
    _
  %s4 = ssub.s32 1, %s2
  %s5 = scalar_select 0, %s4, %s2
  $region1: #{tpu_custom_call.1} parent=0
    #allocation2 [shape = 'u8[8192]{0}', space=vmem, size = 0x2000, scoped, tag = 'input window, operand 0, single buffered']
    #allocation3 [shape = 's32[1]{0}', space=sflag, size = 0x4, scoped, tag = 'scoped memory for tpu_custom_call.1']
    #allocation4 [shape = 's32[1]{0}', space=sflag, size = 0x4, scoped, tag = 'scoped memory for tpu_custom_call.1']
    #allocation5 [shape = 'u8[8192]{0}', space=vmem, size = 0x2000, scoped, tag = 'output window, operand 0, single buffered']
    %6 = vsyncpa [#allocation3], 0
    %7 = vsyncpa [#allocation4], 0
    // Predicated region
    $region2: #{tpu_custom_call.1} parent=1 // pred_check
      _
    $region3: #{tpu_custom_call.1} parent=1 // pred_check_branch
      %9 = sbr.rel (0) target = $region5
    $region4: #{tpu_custom_call.1} parent=1 // pred_region
      %11 = vsyncadd [#allocation3], 0
      %s12 = sshll.u32 %s0, 4
      %s13 = int_to_ptr.hbm [resolvable:$true] %s12
      %s14 = sshll.u32 [#allocation2], 4
      %s15 = int_to_ptr.vmem [resolvable:$true] %s14
      %20 = dma.hbm_to_vmem [thread:$0]  %s13, 256, %s15, [#allocation3], 128, 128, 8
    $region5: #{tpu_custom_call.1} parent=1 // pred_fallthru
      _
    // Predicated region
    $region6: #{tpu_custom_call.1} parent=1 // pred_check
      _
    $region7: #{tpu_custom_call.1} parent=1 // pred_check_branch
      %22 = sbr.rel (0) target = $region9
    $region8: #{tpu_custom_call.1} parent=1 // pred_region
      %24 = dma.done [#allocation3], 256
    $region9: #{tpu_custom_call.1} parent=1 // pred_fallthru
      _
    %v25 = vld [vmem:[#allocation2] sm:$0xff]
    %s26 = scalar_lea.vmem [#allocation2], 8
    %v27 = vld [vmem:[%s26] sm:$0xff]
    %v28 = vadd.f32 %v25, %v27
    %v29 = vmul.f32 %v28, 0.5
    %30 = vst [vmem:[#allocation5] sm:$0xff] %v29
    %v31 = vsub.f32 %v25, %v27
    %v32 = vand.u32 2147483647, %v31
    %v33 = vmul.f32 %v32, 0.5
    %s34 = scalar_lea.vmem [#allocation5], 8
    %35 = vst [vmem:[%s34] sm:$0xff] %v33
    // Predicated region
    $region10: #{tpu_custom_call.1} parent=1 // pred_check
      _
    $region11: #{tpu_custom_call.1} parent=1 // pred_check_branch
      %37 = sbr.rel (0) target = $region13
    $region12: #{tpu_custom_call.1} parent=1 // pred_region
      %39 = vsyncadd [#allocation4], 0
      %s40 = sshll.u32 [#allocation5], 4
      %s41 = int_to_ptr.vmem [resolvable:$true] %s40
      %s42 = sshll.u32 %s1, 4
      %s43 = int_to_ptr.hbm [resolvable:$true] %s42
      %48 = dma.vmem_to_hbm [thread:$0]  %s41, 256, %s43, [#allocation4], 128, 128, 8
    $region13: #{tpu_custom_call.1} parent=1 // pred_fallthru
      _
    // Predicated region
    $region14: #{tpu_custom_call.1} parent=1 // pred_check
      _
    $region15: #{tpu_custom_call.1} parent=1 // pred_check_branch
      %50 = sbr.rel (0) target = $region17
    $region16: #{tpu_custom_call.1} parent=1 // pred_region
      %52 = dma.done [#allocation4], 256
    $region17: #{tpu_custom_call.1} parent=1 // pred_fallthru
      _
    %53 = vsyncpa [#allocation3], 1
    %54 = vsyncpa [#allocation4], 1

</llo_original>
